<compile_context>
chip_gen: v7x
topology: tpu7x:2x2x1
jax: 0.10.0
libtpu: 0.0.40
codegen_flags: <defaults>
</compile_context>

<pallas_src>
import jax
import jax.numpy as jnp
from jax.experimental import pallas as pl
from jax.experimental.pallas import tpu as pltpu

SIGNAL = [0.2, 0.2, 0.2, 0.2, 0.2, 0.2, 0.2, 0.2, 0.2, 0.2, 0.2, 0.2, 0.2, 0.2,
          0.2, 0.2, 0.2, 0.2, 0.2, 0.2, 0.2, 0.2, 0.2, 0.2, 0.2, 0.2, 0.2, 0.15,
          0.2, 0.25, 0.3, 0.35, 0.4, 0.45, 0.5, 0.55, 0.6, 0.65, 0.7, 0.75, 0.8,
          0.8, 0.8, 0.8, 0.8, 0.8, 0.83, 0.8, 0.7, 0.9, 0.8, 0.8, 0.6, 0.9, 0.4,
          0.6, 0.3, 0.1, 0.2, 0.2, 0.2, 0.2, 0.2, 0.2, 0.2, 0.2, 0.2, 0.2, 0.2,
          0.2, 0.2, 0.2, 0.2, 0.2, 0.2, 0.2, 0.2, 0.2, 0.2, 0.2, 0.2, 0.2, 0.2,
          0.2, 0.2, 0.2, 0.2, 0.2, 0.2, 0.2, 0.2, 0.2, 0.2, 0.1, 0.25, 0.3, 0.1,
          0.2, 0.2, 0.2, 0.2, 0.2, 0.2, 0.2, 0.2, 0.2, 0.2, 0.2, 0.2, 0.2, 0.2]

F = len(SIGNAL)  # 110 features


def _round_up(x, m):
    return ((x + m - 1) // m) * m


def _mlp_clamp_kernel(x_ref, w_ref, b_ref, o_ref, acc_ref):
    """One layer-chunk of: x = clamp(x @ W_l + b_l, 0, 1).

    Grid = (batch_blocks, layer_chunks). Weight/bias chunks stream through
    VMEM (double-buffered by the BlockSpec pipeline); activations are carried
    across chunks in a persistent VMEM scratch.

    x_ref:   (TB, Fp)      f32 input activations (consumed at chunk 0)
    w_ref:   (Lt, Fp, Fp)  bf16 weight chunk, (in, out) layout, zero-padded
    b_ref:   (Lt, 1, Fp)   f32 bias chunk, zero-padded
    o_ref:   (TB, Fp)      output (stored at the last chunk)
    acc_ref: (TB, Fp)      f32 activation carry across layer chunks
    """
    lc = pl.program_id(1)

    @pl.when(lc == 0)
    def _():
        acc_ref[...] = x_ref[...]

    x = acc_ref[...]
    # Bounded static unroll (Lt <= 8): LLO can hoist next-layer weight loads
    # under the current layer's MXU drain without unbounded code growth.
    for l in range(w_ref.shape[0]):
        y = jnp.dot(x.astype(jnp.bfloat16), w_ref[l],
                    preferred_element_type=jnp.float32)  # bf16 MXU, f32 acc
        x = jnp.clip(y + b_ref[l], 0.0, 1.0)             # f32 VPU (v5e-safe)
    acc_ref[...] = x

    @pl.when(lc == pl.num_programs(1) - 1)
    def _():
        o_ref[...] = x.astype(o_ref.dtype)


def issue46_forward(xb, weights_t, biases, *, batch_block=512, layer_chunk=8):
    """xb: (B, F); weights_t: (L, F, F) with (in, out) layout; biases: (L, 1, F)."""
    B, Fin = xb.shape
    L = weights_t.shape[0]
    Fp = _round_up(Fin, 128)  # lane-dense padded feature dim (110 -> 128)

    # Zero-pad features; padded W rows/cols and bias entries are exactly 0, so
    # padded lanes stay 0 through every (matmul + bias + clamp) layer -> exact.
    x_p = jnp.pad(xb, ((0, 0), (0, Fp - Fin)))
    w_p = jnp.pad(weights_t, ((0, 0), (0, Fp - Fin), (0, Fp - Fin))).astype(jnp.bfloat16)
    b_p = jnp.pad(biases, ((0, 0), (0, 0), (0, Fp - Fin)))

    # Layer-chunking for streaming: pad L up to a multiple of Lt with identity
    # layers (W=I, b=0). After any real layer x is already in [0, 1], so the
    # pad layers are a no-op up to one bf16 rounding of the MXU LHS.
    Lt = min(L, layer_chunk)
    L_pad = _round_up(L, Lt)
    if L_pad != L:
        eye = jnp.broadcast_to(jnp.eye(Fp, dtype=jnp.bfloat16)[None],
                               (L_pad - L, Fp, Fp))
        w_p = jnp.concatenate([w_p, eye], axis=0)
        b_p = jnp.concatenate(
            [b_p, jnp.zeros((L_pad - L, 1, Fp), b_p.dtype)], axis=0)

    # Batch tile: multiple of 8 sublanes, as large as batch_block allows, but
    # capped so B >= 16 yields at least 2 blocks (v7x megacore sharding of the
    # "parallel" axis). At B=8 this is a single (8, 128) block.
    TB = min(batch_block, _round_up(B, 8))
    if B >= 16:
        TB = min(TB, _round_up(pl.cdiv(_round_up(B, 8), 2), 8))
    Bp = _round_up(B, TB)
    x_p = jnp.pad(x_p, ((0, Bp - B), (0, 0)))

    grid = (Bp // TB, L_pad // Lt)  # (parallel batch, arbitrary layer chunks)

    cost = pl.CostEstimate(
        flops=2 * Bp * L_pad * Fp * Fp,
        transcendentals=0,
        # weights/biases are re-streamed once per batch block; activations
        # read + written once each.
        bytes_accessed=(Bp // TB) * (L_pad * Fp * Fp * 2 + L_pad * Fp * 4)
        + 2 * Bp * Fp * 4,
    )

    out = pl.pallas_call(
        _mlp_clamp_kernel,
        out_shape=jax.ShapeDtypeStruct((Bp, Fp), xb.dtype),
        grid=grid,
        in_specs=[
            pl.BlockSpec((TB, Fp), lambda i, l: (i, 0)),
            pl.BlockSpec((Lt, Fp, Fp), lambda i, l: (l, 0, 0)),
            pl.BlockSpec((Lt, 1, Fp), lambda i, l: (l, 0, 0)),
        ],
        out_specs=pl.BlockSpec((TB, Fp), lambda i, l: (i, 0)),
        scratch_shapes=[pltpu.VMEM((TB, Fp), jnp.float32)],
        compiler_params=pltpu.CompilerParams(
            dimension_semantics=("parallel", "arbitrary")),
        cost_estimate=cost,
    )(x_p, w_p, b_p)

    return out[:B, :Fin]


def init_params(key, n_layers, f):
    """Deterministic init matching nn.Linear's U(-1/sqrt(fan_in), 1/sqrt(fan_in))."""
    bound = 1.0 / jnp.sqrt(jnp.float32(f))
    kw, kb = jax.random.split(key)
    # PyTorch Linear weight is (out, in); we store transposed (L, in, out).
    w = jax.random.uniform(kw, (n_layers, f, f), jnp.float32, -bound, bound)
    b = jax.random.uniform(kb, (n_layers, 1, f), jnp.float32, -bound, bound)
    return w, b


def reference_forward(xb, weights_t, biases):
    out = xb
    for l in range(weights_t.shape[0]):
        out = jnp.clip(out @ weights_t[l] + biases[l], 0.0, 1.0)
    return out


if __name__ == "__main__":
    n_layers = 3
    batch = 8

    key = jax.random.PRNGKey(0)
    k_x, k_p = jax.random.split(key)

    # Batch of signals: the canonical SIGNAL plus small deterministic noise.
    base = jnp.asarray(SIGNAL, dtype=jnp.float32)
    noise = 0.05 * jax.random.normal(k_x, (batch, F), dtype=jnp.float32)
    xb = base[None, :] + noise  # (B, F)

    weights_t, biases = init_params(k_p, n_layers, F)

    out = issue46_forward(xb, weights_t, biases)
    out = jax.block_until_ready(out)

    ref = reference_forward(xb, weights_t, biases)  # pure-f32 reference
    assert out.shape == (batch, F)
    # bf16 MXU operands with f32 accumulation -> relaxed tolerance vs f32 ref
    # (calibrated for shallow L; deepen tolerance with depth if L grows).
    assert jnp.allclose(out, ref, atol=2e-2, rtol=0.0), "mismatch vs JAX reference"

    print("KERNEL_OK")
</pallas_src>

<mosaic_0001>
module attributes {stable_mosaic.version = 11 : i64} {
  func.func @_mlp_clamp_kernel(%arg0: i32, %arg1: i32, %arg2: memref<8x128xf32, #tpu.memory_space<vmem>>, %arg3: memref<3x128x128xbf16, #tpu.memory_space<vmem>>, %arg4: memref<3x1x128xf32, #tpu.memory_space<vmem>>, %arg5: memref<8x128xf32, #tpu.memory_space<vmem>>, %arg6: memref<8x128xf32, #tpu.memory_space<vmem>>) attributes {dimension_semantics = [#tpu.dimension_semantics<parallel>, #tpu.dimension_semantics<arbitrary>], iteration_bounds = array<i64: 1, 1>, scalar_prefetch = 0 : i64, scratch_operands = 1 : i64, tpu.core_type = #tpu.core_type<tc>, window_params = [{transform_indices = @transform_0, window_bounds = array<i64: 8, 128>}, {transform_indices = @transform_1, window_bounds = array<i64: 3, 128, 128>}, {transform_indices = @transform_2, window_bounds = array<i64: 3, 1, 128>}, {transform_indices = @transform_3, window_bounds = array<i64: 8, 128>}]} {
    %c0_i32 = arith.constant 0 : i32
    %0 = arith.cmpi eq, %arg1, %c0_i32 : i32
    %1 = arith.extui %0 : i1 to i32
    %c0_i32_0 = arith.constant 0 : i32
    %2 = arith.cmpi ne, %1, %c0_i32_0 : i32
    scf.if %2 {
      %c0_30 = arith.constant 0 : index
      %c0_31 = arith.constant 0 : index
      %44 = vector.load %arg2[%c0_30, %c0_31] : memref<8x128xf32, #tpu.memory_space<vmem>>, vector<8x128xf32>
      %c0_32 = arith.constant 0 : index
      %c0_33 = arith.constant 0 : index
      %45 = vector.load %arg6[%c0_32, %c0_33] : memref<8x128xf32, #tpu.memory_space<vmem>>, vector<8x128xf32>
      tpu.vector_store %arg6[%c0_32, %c0_33], %44 {strides = array<i32>} : memref<8x128xf32, #tpu.memory_space<vmem>>, vector<8x128xf32>,
    } else {
    }
    %c0 = arith.constant 0 : index
    %c0_1 = arith.constant 0 : index
    %3 = vector.load %arg6[%c0, %c0_1] : memref<8x128xf32, #tpu.memory_space<vmem>>, vector<8x128xf32>
    %4 = arith.truncf %3 : vector<8x128xf32> to vector<8x128xbf16>
    %c0_2 = arith.constant 0 : index
    %c0_3 = arith.constant 0 : index
    %c0_4 = arith.constant 0 : index
    %5 = vector.load %arg3[%c0_2, %c0_3, %c0_4] : memref<3x128x128xbf16, #tpu.memory_space<vmem>>, vector<1x128x128xbf16>
    %6 = vector.shape_cast %5 : vector<1x128x128xbf16> to vector<128x128xbf16>
    %cst = arith.constant dense<0.000000e+00> : vector<8x128xf32>
    %7 = tpu.matmul %4, %6, %cst {dimension_numbers = #tpu.dot_dimension_numbers<[1], [0], [0], [1], [0, 0, 1, 1], [], []>} : vector<8x128xbf16>, vector<128x128xbf16>, vector<8x128xf32> -> vector<8x128xf32>
    %c0_5 = arith.constant 0 : index
    %c0_6 = arith.constant 0 : index
    %c0_7 = arith.constant 0 : index
    %8 = vector.load %arg4[%c0_5, %c0_6, %c0_7] : memref<3x1x128xf32, #tpu.memory_space<vmem>>, vector<1x1x128xf32>
    %9 = vector.shape_cast %8 : vector<1x1x128xf32> to vector<1x128xf32>
    %10 = vector.broadcast %9 : vector<1x128xf32> to vector<8x128xf32>
    %11 = arith.addf %7, %10 : vector<8x128xf32>
    %cst_8 = arith.constant 0.000000e+00 : f32
    %cst_9 = arith.constant 1.000000e+00 : f32
    %12 = vector.broadcast %cst_8 : f32 to vector<8x128xf32>
    %13 = arith.maximumf %12, %11 : vector<8x128xf32>
    %14 = vector.broadcast %cst_9 : f32 to vector<8x128xf32>
    %15 = arith.minimumf %14, %13 : vector<8x128xf32>
    %16 = arith.truncf %15 : vector<8x128xf32> to vector<8x128xbf16>
    %c1 = arith.constant 1 : index
    %c0_10 = arith.constant 0 : index
    %c0_11 = arith.constant 0 : index
    %17 = vector.load %arg3[%c1, %c0_10, %c0_11] : memref<3x128x128xbf16, #tpu.memory_space<vmem>>, vector<1x128x128xbf16>
    %18 = vector.shape_cast %17 : vector<1x128x128xbf16> to vector<128x128xbf16>
    %cst_12 = arith.constant dense<0.000000e+00> : vector<8x128xf32>
    %19 = tpu.matmul %16, %18, %cst_12 {dimension_numbers = #tpu.dot_dimension_numbers<[1], [0], [0], [1], [0, 0, 1, 1], [], []>} : vector<8x128xbf16>, vector<128x128xbf16>, vector<8x128xf32> -> vector<8x128xf32>
    %c1_13 = arith.constant 1 : index
    %c0_14 = arith.constant 0 : index
    %c0_15 = arith.constant 0 : index
    %20 = vector.load %arg4[%c1_13, %c0_14, %c0_15] : memref<3x1x128xf32, #tpu.memory_space<vmem>>, vector<1x1x128xf32>
    %21 = vector.shape_cast %20 : vector<1x1x128xf32> to vector<1x128xf32>
    %22 = vector.broadcast %21 : vector<1x128xf32> to vector<8x128xf32>
    %23 = arith.addf %19, %22 : vector<8x128xf32>
    %cst_16 = arith.constant 0.000000e+00 : f32
    %cst_17 = arith.constant 1.000000e+00 : f32
    %24 = vector.broadcast %cst_16 : f32 to vector<8x128xf32>
    %25 = arith.maximumf %24, %23 : vector<8x128xf32>
    %26 = vector.broadcast %cst_17 : f32 to vector<8x128xf32>
    %27 = arith.minimumf %26, %25 : vector<8x128xf32>
    %28 = arith.truncf %27 : vector<8x128xf32> to vector<8x128xbf16>
    %c2 = arith.constant 2 : index
    %c0_18 = arith.constant 0 : index
    %c0_19 = arith.constant 0 : index
    %29 = vector.load %arg3[%c2, %c0_18, %c0_19] : memref<3x128x128xbf16, #tpu.memory_space<vmem>>, vector<1x128x128xbf16>
    %30 = vector.shape_cast %29 : vector<1x128x128xbf16> to vector<128x128xbf16>
    %cst_20 = arith.constant dense<0.000000e+00> : vector<8x128xf32>
    %31 = tpu.matmul %28, %30, %cst_20 {dimension_numbers = #tpu.dot_dimension_numbers<[1], [0], [0], [1], [0, 0, 1, 1], [], []>} : vector<8x128xbf16>, vector<128x128xbf16>, vector<8x128xf32> -> vector<8x128xf32>
    %c2_21 = arith.constant 2 : index
    %c0_22 = arith.constant 0 : index
    %c0_23 = arith.constant 0 : index
    %32 = vector.load %arg4[%c2_21, %c0_22, %c0_23] : memref<3x1x128xf32, #tpu.memory_space<vmem>>, vector<1x1x128xf32>
    %33 = vector.shape_cast %32 : vector<1x1x128xf32> to vector<1x128xf32>
    %34 = vector.broadcast %33 : vector<1x128xf32> to vector<8x128xf32>
    %35 = arith.addf %31, %34 : vector<8x128xf32>
    %cst_24 = arith.constant 0.000000e+00 : f32
    %cst_25 = arith.constant 1.000000e+00 : f32
    %36 = vector.broadcast %cst_24 : f32 to vector<8x128xf32>
    %37 = arith.maximumf %36, %35 : vector<8x128xf32>
    %38 = vector.broadcast %cst_25 : f32 to vector<8x128xf32>
    %39 = arith.minimumf %38, %37 : vector<8x128xf32>
    %c0_26 = arith.constant 0 : index
    %c0_27 = arith.constant 0 : index
    %40 = vector.load %arg6[%c0_26, %c0_27] : memref<8x128xf32, #tpu.memory_space<vmem>>, vector<8x128xf32>
    tpu.vector_store %arg6[%c0_26, %c0_27], %39 {strides = array<i32>} : memref<8x128xf32, #tpu.memory_space<vmem>>, vector<8x128xf32>,
    %c0_i32_28 = arith.constant 0 : i32
    %41 = arith.cmpi eq, %arg1, %c0_i32_28 : i32
    %42 = arith.extui %41 : i1 to i32
    %c0_i32_29 = arith.constant 0 : i32
    %43 = arith.cmpi ne, %42, %c0_i32_29 : i32
    scf.if %43 {
      %c0_30 = arith.constant 0 : index
      %c0_31 = arith.constant 0 : index
      %44 = vector.load %arg5[%c0_30, %c0_31] : memref<8x128xf32, #tpu.memory_space<vmem>>, vector<8x128xf32>
      tpu.vector_store %arg5[%c0_30, %c0_31], %39 {strides = array<i32>} : memref<8x128xf32, #tpu.memory_space<vmem>>, vector<8x128xf32>,
    } else {
    }
    return
  }
  func.func @transform_0(%arg0: i32, %arg1: i32) -> (i32, i32) {
    %c0_i32 = arith.constant 0 : i32
    %c0_i32_0 = arith.constant 0 : i32
    return %arg0, %c0_i32 : i32, i32
  }
  func.func @transform_1(%arg0: i32, %arg1: i32) -> (i32, i32, i32) {
    %c0_i32 = arith.constant 0 : i32
    %c0_i32_0 = arith.constant 0 : i32
    %c0_i32_1 = arith.constant 0 : i32
    return %arg1, %c0_i32, %c0_i32_0 : i32, i32, i32
  }
  func.func @transform_2(%arg0: i32, %arg1: i32) -> (i32, i32, i32) {
    %c0_i32 = arith.constant 0 : i32
    %c0_i32_0 = arith.constant 0 : i32
    %c0_i32_1 = arith.constant 0 : i32
    return %arg1, %c0_i32, %c0_i32_0 : i32, i32, i32
  }
  func.func @transform_3(%arg0: i32, %arg1: i32) -> (i32, i32) {
    %c0_i32 = arith.constant 0 : i32
    %c0_i32_0 = arith.constant 0 : i32
    return %arg0, %c0_i32 : i32, i32
  }
}

</mosaic_0001>

<llo_original>
// kernel: tpu_custom_call.1
$region0: #{tpu_custom_call.1}
  #allocation0 [shape = 'u32[]', space=smem, size = 0x4, offset = 0x4, fixed_abs, tag = 'smem constant byte address 0x4 - core index']
  #allocation1 [shape = 'u32[144,128]{1,0:T(1,128)}', space=vmem, size = 0x12000, scoped, tag = 'internal scratch']
  #allocation2 [shape = 'f32[8,128]{1,0:T(8,128)}', space=vmem, size = 0x1000, scoped, tag = 'scratch operand']
  %s0 = inlined_call_operand.hbm [shape: f32[8,128], index: 0, kind: input, shape index: {}]
  %s1 = inlined_call_operand.hbm [shape: bf16[3,128,128], index: 1, kind: input, shape index: {}]
  %s2 = inlined_call_operand.vmem [shape: f32[3,1,128], index: 2, kind: input, shape index: {}]
  %s3 = inlined_call_operand.hbm [shape: f32[8,128], index: 3, kind: output, shape index: {}]
  %s4 = sld [smem:[#allocation0]]
  $region38: #{tpu_custom_call.1} parent=0
    _
  %s6 = ssub.s32 1, %s4
  %s7 = scalar_select 0, %s6, %s4
  $region1: #{tpu_custom_call.1} parent=0
    #allocation3 [shape = 'u8[4096]{0}', space=vmem, size = 0x1000, scoped, tag = 'input window, operand 0, single buffered']
    #allocation4 [shape = 's32[1]{0}', space=sflag, size = 0x4, scoped, tag = 'scoped memory for tpu_custom_call.1']
    #allocation5 [shape = 's32[1]{0}', space=sflag, size = 0x4, scoped, tag = 'scoped memory for tpu_custom_call.1']
    #allocation6 [shape = 'u8[98304]{0}', space=vmem, size = 0x18000, scoped, tag = 'input window, operand 1, single buffered']
    #allocation7 [shape = 's32[1]{0}', space=sflag, size = 0x4, scoped, tag = 'scoped memory for tpu_custom_call.1']
    #allocation8 [shape = 'u8[4096]{0}', space=vmem, size = 0x1000, scoped, tag = 'output window, operand 0, single buffered']
    %8 = vsyncpa [#allocation4], 0
    %9 = vsyncpa [#allocation7], 0
    %10 = vsyncpa [#allocation5], 0
    // Predicated region
    $region2: #{tpu_custom_call.1} parent=1 // pred_check
      _
    $region3: #{tpu_custom_call.1} parent=1 // pred_check_branch
      %12 = sbr.rel (0) target = $region5
    $region4: #{tpu_custom_call.1} parent=1 // pred_region
      %s14 = ssub.s32 128, 128
      %15 = vsyncadd [#allocation4], %s14
      %s17 = sshll.u32 [#allocation3], 4
      %s18 = int_to_ptr.vmem [resolvable:$true] %s17
      %20 = dma.hbm_to_vmem [thread:$0]  %s0, 128, %s18, [#allocation4]
    $region5: #{tpu_custom_call.1} parent=1 // pred_fallthru
      _
    // Predicated region
    $region6: #{tpu_custom_call.1} parent=1 // pred_check
      _
    $region7: #{tpu_custom_call.1} parent=1 // pred_check_branch
      %22 = sbr.rel (0) target = $region9
    $region8: #{tpu_custom_call.1} parent=1 // pred_region
      %s24 = ssub.s32 3072, 3072
      %25 = vsyncadd [#allocation7], %s24
      %s26 = sshll.u32 [#allocation6], 4
      %s27 = int_to_ptr.vmem [resolvable:$true] %s26
      %32 = dma.hbm_to_vmem [thread:$0]  %s1, 3072, %s27, [#allocation7], 64, 64, 4
    $region9: #{tpu_custom_call.1} parent=1 // pred_fallthru
      _
    // Predicated region
    $region10: #{tpu_custom_call.1} parent=1 // pred_check
      _
    $region11: #{tpu_custom_call.1} parent=1 // pred_check_branch
      %34 = sbr.rel (0) target = $region13
    $region12: #{tpu_custom_call.1} parent=1 // pred_region
      _
    $region13: #{tpu_custom_call.1} parent=1 // pred_fallthru
      _
    // Predicated region
    $region14: #{tpu_custom_call.1} parent=1 // pred_check
      _
    $region15: #{tpu_custom_call.1} parent=1 // pred_check_branch
      %36 = sbr.rel (0) target = $region17
    $region16: #{tpu_custom_call.1} parent=1 // pred_region
      %37 = dma.done [#allocation4], 128
    $region17: #{tpu_custom_call.1} parent=1 // pred_fallthru
      _
    // Predicated region
    $region18: #{tpu_custom_call.1} parent=1 // pred_check
      _
    $region19: #{tpu_custom_call.1} parent=1 // pred_check_branch
      %39 = sbr.rel (0) target = $region21
    $region20: #{tpu_custom_call.1} parent=1 // pred_region
      %40 = dma.done [#allocation7], 3072
    $region21: #{tpu_custom_call.1} parent=1 // pred_fallthru
      _
    %p42 = scmp.eq.s32.totalorder 0, 0
    // Predicated region
    $region22: #{tpu_custom_call.1} parent=1 // pred_check
      %p43 = pneg %p42
    $region23: #{tpu_custom_call.1} parent=1 // pred_check_branch
      %45 = sbr.rel (%p43) target = $region25
    $region24: #{tpu_custom_call.1} parent=1 // pred_region
      %v46 = vld [vmem:[#allocation3] sm:$0xff]
      %47 = vst [vmem:[#allocation2] sm:$0xff] %v46
    $region25: #{tpu_custom_call.1} parent=1 // pred_fallthru
      _
    %v48 = vld [vmem:[#allocation2] sm:$0xff]
    %v49 = vpack.c.bf16 %v48, %v48
    %v50 = vld [vmem:[#allocation6] sm:$0xf]
    %v51 = vld [vmem:[#allocation6 + $0x4] sm:$0xf]
    %v52 = vld [vmem:[#allocation6 + $0x8] sm:$0xf]
    %v53 = vld [vmem:[#allocation6 + $0xc] sm:$0xf]
    %v54 = vld [vmem:[#allocation6 + $0x10] sm:$0xf]
    %v55 = vld [vmem:[#allocation6 + $0x14] sm:$0xf]
    %v56 = vld [vmem:[#allocation6 + $0x18] sm:$0xf]
    %v57 = vld [vmem:[#allocation6 + $0x1c] sm:$0xf]
    %v58 = vld [vmem:[#allocation6 + $0x20] sm:$0xf]
    %v59 = vld [vmem:[#allocation6 + $0x24] sm:$0xf]
    %v60 = vld [vmem:[#allocation6 + $0x28] sm:$0xf]
    %v61 = vld [vmem:[#allocation6 + $0x2c] sm:$0xf]
    %v62 = vld [vmem:[#allocation6 + $0x30] sm:$0xf]
    %v63 = vld [vmem:[#allocation6 + $0x34] sm:$0xf]
    %v64 = vld [vmem:[#allocation6 + $0x38] sm:$0xf]
    %v65 = vld [vmem:[#allocation6 + $0x3c] sm:$0xf]
    %v66 = vld [vmem:[%s2] sm:$0x1]
    %v68 = vlaneseq
    %v69 = vshrl.u32 %v68, 7
    %v70 = vsub.s32 0, %v69
    %v71 = vrot.slane %v66, %v70
    %v89 = vunpack.c.l.b16 %v50
    %v90 = vunpack.c.l.b16 %v51
    %v91 = vunpack.c.l.b16 %v52
    %v92 = vunpack.c.l.b16 %v53
    %v93 = vunpack.c.l.b16 %v54
    %v94 = vunpack.c.l.b16 %v55
    %v95 = vunpack.c.l.b16 %v56
    %v96 = vunpack.c.l.b16 %v57
    %v97 = vunpack.c.l.b16 %v58
    %v98 = vunpack.c.l.b16 %v59
    %v99 = vunpack.c.l.b16 %v60
    %v100 = vunpack.c.l.b16 %v61
    %v101 = vunpack.c.l.b16 %v62
    %v102 = vunpack.c.l.b16 %v63
    %v103 = vunpack.c.l.b16 %v64
    %v104 = vunpack.c.l.b16 %v65
    %v105 = vpack.c.b16 %v90, %v89
    %v106 = vpack.c.b16 %v92, %v91
    %v107 = vpack.c.b16 %v94, %v93
    %v108 = vpack.c.b16 %v96, %v95
    %v109 = vpack.c.b16 %v98, %v97
    %v110 = vpack.c.b16 %v100, %v99
    %v111 = vpack.c.b16 %v102, %v101
    %v112 = vpack.c.b16 %v104, %v103
    %121 = vmatprep.subr.bf16.mxu0 0
    %122 = vmatpush1.bf16.msra.mxu0 %v105
    %123 = vmatprep.subr.bf16.mxu0 0
    %124 = vmatpush1.bf16.msra.mxu0 %v106
    %125 = vmatprep.subr.bf16.mxu0 0
    %126 = vmatpush1.bf16.msra.mxu0 %v107
    %127 = vmatprep.subr.bf16.mxu0 0
    %128 = vmatpush1.bf16.msra.mxu0 %v108
    %129 = vmatprep.subr.bf16.mxu0 0
    %130 = vmatpush1.bf16.msra.mxu0 %v109
    %131 = vmatprep.subr.bf16.mxu0 0
    %132 = vmatpush1.bf16.msra.mxu0 %v110
    %133 = vmatprep.subr.bf16.mxu0 0
    %134 = vmatpush1.bf16.msra.mxu0 %v111
    %135 = vmatprep.subr.bf16.mxu0 0
    %136 = vmatpush1.bf16.msra.mxu0 %v112
    %137 = vmatprep.subr.bf16.mxu0 0
    %138 = vmatpush1.bf16.msra.mxu0 0
    %139 = vmatprep.subr.bf16.mxu0 0
    %140 = vmatpush1.bf16.msra.mxu0 0
    %141 = vmatprep.subr.bf16.mxu0 0
    %142 = vmatpush1.bf16.msra.mxu0 0
    %143 = vmatprep.subr.bf16.mxu0 0
    %144 = vmatpush1.bf16.msra.mxu0 0
    %145 = vmatprep.subr.bf16.mxu0 0
    %146 = vmatpush1.bf16.msra.mxu0 0
    %147 = vmatprep.subr.bf16.mxu0 0
    %148 = vmatpush1.bf16.msra.mxu0 0
    %149 = vmatprep.subr.bf16.mxu0 0
    %150 = vmatpush1.bf16.msra.mxu0 0
    %151 = vmatprep.subr.bf16.mxu0 0
    %152 = vmatpush1.bf16.msra.mxu0 0
    %153 = vmatprep.mubr.bf16.mxu0 0
    %154 = vmatmul.mubr.bf16.gmra.mrb[0].mxu0 %v49
    %v155 = vpop.f32.mrb[0].mxu0
    %v156 = vadd.f32 %v71, %v155
    %v157 = vpop.f32.mrb[0].mxu0
    %v158 = vpop.f32.mrb[0].mxu0
    %v159 = vpop.f32.mrb[0].mxu0
    %160 = vdwg.mxu0
    %v161 = vmax.f32 %v156, 0.0
    %v162 = vmin.f32 %v161, 1.0
    %v163 = vpack.c.bf16 %v162, %v162
    %s164 = scalar_lea.vmem [#allocation6], 64
    %v165 = vld [vmem:[%s164] sm:$0xf]
    %v166 = vld [vmem:[%s164 + $0x4] sm:$0xf]
    %v167 = vld [vmem:[%s164 + $0x8] sm:$0xf]
    %v168 = vld [vmem:[%s164 + $0xc] sm:$0xf]
    %v169 = vld [vmem:[%s164 + $0x10] sm:$0xf]
    %v170 = vld [vmem:[%s164 + $0x14] sm:$0xf]
    %v171 = vld [vmem:[%s164 + $0x18] sm:$0xf]
    %v172 = vld [vmem:[%s164 + $0x1c] sm:$0xf]
    %v173 = vld [vmem:[%s164 + $0x20] sm:$0xf]
    %v174 = vld [vmem:[%s164 + $0x24] sm:$0xf]
    %v175 = vld [vmem:[%s164 + $0x28] sm:$0xf]
    %v176 = vld [vmem:[%s164 + $0x2c] sm:$0xf]
    %v177 = vld [vmem:[%s164 + $0x30] sm:$0xf]
    %v178 = vld [vmem:[%s164 + $0x34] sm:$0xf]
    %v179 = vld [vmem:[%s164 + $0x38] sm:$0xf]
    %v180 = vld [vmem:[%s164 + $0x3c] sm:$0xf]
    %s181 = scalar_lea.vmem %s2, 1
    %v182 = vld [vmem:[%s181] sm:$0x1]
    %v184 = vlaneseq
    %v185 = vshrl.u32 %v184, 7
    %v186 = vsub.s32 0, %v185
    %v187 = vrot.slane %v182, %v186
    %v205 = vunpack.c.l.b16 %v165
    %v206 = vunpack.c.l.b16 %v166
    %v207 = vunpack.c.l.b16 %v167
    %v208 = vunpack.c.l.b16 %v168
    %v209 = vunpack.c.l.b16 %v169
    %v210 = vunpack.c.l.b16 %v170
    %v211 = vunpack.c.l.b16 %v171
    %v212 = vunpack.c.l.b16 %v172
    %v213 = vunpack.c.l.b16 %v173
    %v214 = vunpack.c.l.b16 %v174
    %v215 = vunpack.c.l.b16 %v175
    %v216 = vunpack.c.l.b16 %v176
    %v217 = vunpack.c.l.b16 %v177
    %v218 = vunpack.c.l.b16 %v178
    %v219 = vunpack.c.l.b16 %v179
    %v220 = vunpack.c.l.b16 %v180
    %v221 = vpack.c.b16 %v206, %v205
    %v222 = vpack.c.b16 %v208, %v207
    %v223 = vpack.c.b16 %v210, %v209
    %v224 = vpack.c.b16 %v212, %v211
    %v225 = vpack.c.b16 %v214, %v213
    %v226 = vpack.c.b16 %v216, %v215
    %v227 = vpack.c.b16 %v218, %v217
    %v228 = vpack.c.b16 %v220, %v219
    %237 = vmatprep.subr.bf16.mxu0 0
    %238 = vmatpush1.bf16.msra.mxu0 %v221
    %239 = vmatprep.subr.bf16.mxu0 0
    %240 = vmatpush1.bf16.msra.mxu0 %v222
    %241 = vmatprep.subr.bf16.mxu0 0
    %242 = vmatpush1.bf16.msra.mxu0 %v223
    %243 = vmatprep.subr.bf16.mxu0 0
    %244 = vmatpush1.bf16.msra.mxu0 %v224
    %245 = vmatprep.subr.bf16.mxu0 0
    %246 = vmatpush1.bf16.msra.mxu0 %v225
    %247 = vmatprep.subr.bf16.mxu0 0
    %248 = vmatpush1.bf16.msra.mxu0 %v226
    %249 = vmatprep.subr.bf16.mxu0 0
    %250 = vmatpush1.bf16.msra.mxu0 %v227
    %251 = vmatprep.subr.bf16.mxu0 0
    %252 = vmatpush1.bf16.msra.mxu0 %v228
    %253 = vmatprep.subr.bf16.mxu0 0
    %254 = vmatpush1.bf16.msra.mxu0 0
    %255 = vmatprep.subr.bf16.mxu0 0
    %256 = vmatpush1.bf16.msra.mxu0 0
    %257 = vmatprep.subr.bf16.mxu0 0
    %258 = vmatpush1.bf16.msra.mxu0 0
    %259 = vmatprep.subr.bf16.mxu0 0
    %260 = vmatpush1.bf16.msra.mxu0 0
    %261 = vmatprep.subr.bf16.mxu0 0
    %262 = vmatpush1.bf16.msra.mxu0 0
    %263 = vmatprep.subr.bf16.mxu0 0
    %264 = vmatpush1.bf16.msra.mxu0 0
    %265 = vmatprep.subr.bf16.mxu0 0
    %266 = vmatpush1.bf16.msra.mxu0 0
    %267 = vmatprep.subr.bf16.mxu0 0
    %268 = vmatpush1.bf16.msra.mxu0 0
    %269 = vmatprep.mubr.bf16.mxu0 0
    %270 = vmatmul.mubr.bf16.gmra.mrb[0].mxu0 %v163
    %v271 = vpop.f32.mrb[0].mxu0
    %v272 = vadd.f32 %v187, %v271
    %v273 = vpop.f32.mrb[0].mxu0
    %v274 = vpop.f32.mrb[0].mxu0
    %v275 = vpop.f32.mrb[0].mxu0
    %276 = vdwg.mxu0
    %v277 = vmax.f32 %v272, 0.0
    %v278 = vmin.f32 %v277, 1.0
    %v279 = vpack.c.bf16 %v278, %v278
    %s280 = scalar_lea.vmem [#allocation6], 128
    %v281 = vld [vmem:[%s280] sm:$0xf]
    %v282 = vld [vmem:[%s280 + $0x4] sm:$0xf]
    %v283 = vld [vmem:[%s280 + $0x8] sm:$0xf]
    %v284 = vld [vmem:[%s280 + $0xc] sm:$0xf]
    %v285 = vld [vmem:[%s280 + $0x10] sm:$0xf]
    %v286 = vld [vmem:[%s280 + $0x14] sm:$0xf]
    %v287 = vld [vmem:[%s280 + $0x18] sm:$0xf]
    %v288 = vld [vmem:[%s280 + $0x1c] sm:$0xf]
    %v289 = vld [vmem:[%s280 + $0x20] sm:$0xf]
    %v290 = vld [vmem:[%s280 + $0x24] sm:$0xf]
    %v291 = vld [vmem:[%s280 + $0x28] sm:$0xf]
    %v292 = vld [vmem:[%s280 + $0x2c] sm:$0xf]
    %v293 = vld [vmem:[%s280 + $0x30] sm:$0xf]
    %v294 = vld [vmem:[%s280 + $0x34] sm:$0xf]
    %v295 = vld [vmem:[%s280 + $0x38] sm:$0xf]
    %v296 = vld [vmem:[%s280 + $0x3c] sm:$0xf]
    %s297 = scalar_lea.vmem %s2, 2
    %v298 = vld [vmem:[%s297] sm:$0x1]
    %v300 = vlaneseq
    %v301 = vshrl.u32 %v300, 7
    %v302 = vsub.s32 0, %v301
    %v303 = vrot.slane %v298, %v302
    %v321 = vunpack.c.l.b16 %v281
    %v322 = vunpack.c.l.b16 %v282
    %v323 = vunpack.c.l.b16 %v283
    %v324 = vunpack.c.l.b16 %v284
    %v325 = vunpack.c.l.b16 %v285
    %v326 = vunpack.c.l.b16 %v286
    %v327 = vunpack.c.l.b16 %v287
    %v328 = vunpack.c.l.b16 %v288
    %v329 = vunpack.c.l.b16 %v289
    %v330 = vunpack.c.l.b16 %v290
    %v331 = vunpack.c.l.b16 %v291
    %v332 = vunpack.c.l.b16 %v292
    %v333 = vunpack.c.l.b16 %v293
    %v334 = vunpack.c.l.b16 %v294
    %v335 = vunpack.c.l.b16 %v295
    %v336 = vunpack.c.l.b16 %v296
    %v337 = vpack.c.b16 %v322, %v321
    %v338 = vpack.c.b16 %v324, %v323
    %v339 = vpack.c.b16 %v326, %v325
    %v340 = vpack.c.b16 %v328, %v327
    %v341 = vpack.c.b16 %v330, %v329
    %v342 = vpack.c.b16 %v332, %v331
    %v343 = vpack.c.b16 %v334, %v333
    %v344 = vpack.c.b16 %v336, %v335
    %353 = vmatprep.subr.bf16.mxu0 0
    %354 = vmatpush1.bf16.msra.mxu0 %v337
    %355 = vmatprep.subr.bf16.mxu0 0
    %356 = vmatpush1.bf16.msra.mxu0 %v338
    %357 = vmatprep.subr.bf16.mxu0 0
    %358 = vmatpush1.bf16.msra.mxu0 %v339
    %359 = vmatprep.subr.bf16.mxu0 0
    %360 = vmatpush1.bf16.msra.mxu0 %v340
    %361 = vmatprep.subr.bf16.mxu0 0
    %362 = vmatpush1.bf16.msra.mxu0 %v341
    %363 = vmatprep.subr.bf16.mxu0 0
    %364 = vmatpush1.bf16.msra.mxu0 %v342
    %365 = vmatprep.subr.bf16.mxu0 0
    %366 = vmatpush1.bf16.msra.mxu0 %v343
    %367 = vmatprep.subr.bf16.mxu0 0
    %368 = vmatpush1.bf16.msra.mxu0 %v344
    %369 = vmatprep.subr.bf16.mxu0 0
    %370 = vmatpush1.bf16.msra.mxu0 0
    %371 = vmatprep.subr.bf16.mxu0 0
    %372 = vmatpush1.bf16.msra.mxu0 0
    %373 = vmatprep.subr.bf16.mxu0 0
    %374 = vmatpush1.bf16.msra.mxu0 0
    %375 = vmatprep.subr.bf16.mxu0 0
    %376 = vmatpush1.bf16.msra.mxu0 0
    %377 = vmatprep.subr.bf16.mxu0 0
    %378 = vmatpush1.bf16.msra.mxu0 0
    %379 = vmatprep.subr.bf16.mxu0 0
    %380 = vmatpush1.bf16.msra.mxu0 0
    %381 = vmatprep.subr.bf16.mxu0 0
    %382 = vmatpush1.bf16.msra.mxu0 0
    %383 = vmatprep.subr.bf16.mxu0 0
    %384 = vmatpush1.bf16.msra.mxu0 0
    %385 = vmatprep.mubr.bf16.mxu0 0
    %386 = vmatmul.mubr.bf16.gmra.mrb[0].mxu0 %v279
    %v387 = vpop.f32.mrb[0].mxu0
    %v388 = vadd.f32 %v303, %v387
    %v389 = vpop.f32.mrb[0].mxu0
    %v390 = vpop.f32.mrb[0].mxu0
    %v391 = vpop.f32.mrb[0].mxu0
    %392 = vdwg.mxu0
    %v393 = vmax.f32 %v388, 0.0
    %v394 = vmin.f32 %v393, 1.0
    %395 = vst [vmem:[#allocation2] sm:$0xff] %v394
    // Predicated region
    $region26: #{tpu_custom_call.1} parent=1 // pred_check
      %p396 = pneg %p42
    $region27: #{tpu_custom_call.1} parent=1 // pred_check_branch
      %398 = sbr.rel (%p396) target = $region29
    $region28: #{tpu_custom_call.1} parent=1 // pred_region
      %399 = vst [vmem:[#allocation8] sm:$0xff] %v394
    $region29: #{tpu_custom_call.1} parent=1 // pred_fallthru
      _
    // Predicated region
    $region30: #{tpu_custom_call.1} parent=1 // pred_check
      _
    $region31: #{tpu_custom_call.1} parent=1 // pred_check_branch
      %401 = sbr.rel (0) target = $region33
    $region32: #{tpu_custom_call.1} parent=1 // pred_region
      %s403 = ssub.s32 128, 128
      %404 = vsyncadd [#allocation5], %s403
      %s406 = sshll.u32 [#allocation8], 4
      %s407 = int_to_ptr.vmem [resolvable:$true] %s406
      %409 = dma.vmem_to_hbm [thread:$0]  %s407, 128, %s3, [#allocation5]
    $region33: #{tpu_custom_call.1} parent=1 // pred_fallthru
      _
    // Predicated region
    $region34: #{tpu_custom_call.1} parent=1 // pred_check
      _
    $region35: #{tpu_custom_call.1} parent=1 // pred_check_branch
      %411 = sbr.rel (0) target = $region37
    $region36: #{tpu_custom_call.1} parent=1 // pred_region
      %412 = dma.done [#allocation5], 128
    $region37: #{tpu_custom_call.1} parent=1 // pred_fallthru
      _
    %413 = vsyncpa [#allocation4], 1
    %414 = vsyncpa [#allocation7], 1
    %415 = vsyncpa [#allocation5], 1

</llo_original>
